<compile_context>
chip_gen: v5e
topology: v5e:2x2
jax: 0.10.0
libtpu: 0.0.40
codegen_flags: <defaults>
</compile_context>

<pallas_src>
import numpy as np
import jax
import jax.numpy as jnp
from jax import lax
from jax.experimental import pallas as pl
from jax.experimental.pallas import tpu as pltpu

_VMEM_LIMIT_BYTES = 32 * 1024 * 1024  # explicit scoped-VMEM budget


# -----------------------------------------------------------------------------
# Helpers
# -----------------------------------------------------------------------------
def _round_up(x, m):
    return ((x + m - 1) // m) * m


def _k_multiple():
    """Vocab (K) padding multiple: 256 on v6e/v7x (2x256 MXU), 128 on v5e/older."""
    try:
        kind = jax.devices()[0].device_kind.lower()
    except Exception:
        return 128
    return 256 if ("v6" in kind or "v7" in kind or "7x" in kind) else 128


def _pick_block_b(B):
    """Largest sublane-aligned (multiple of 8) batch tile <= min(256, B//2) dividing B.

    Guarantees >= 2 grid steps when B >= 16 so both v7x TensorCores get work;
    falls back to the whole batch for tiny B (block then equals the full dim).
    """
    target = min(256, max(8, B // 2))
    best, bb = 0, 8
    while bb <= target:
        if B % bb == 0:
            best = bb
        bb += 8
    return best if best else B


def _split_bf16(w_f32):
    """f32 table -> (hi, lo) bf16 pair with hi + lo == w to ~2^-16 relative.

    Two plain bf16 MXU passes replace the 6-pass f32 HIGHEST matmul; exact here
    because the LHS (one-hot / small integer counts / 0-1 masks) is exactly
    representable in bf16.
    """
    w = jnp.asarray(w_f32, jnp.float32)
    hi = w.astype(jnp.bfloat16)
    lo = (w - hi.astype(jnp.float32)).astype(jnp.bfloat16)
    return hi, lo


# -----------------------------------------------------------------------------
# One-time host-side parameter packing (hoisted out of the forward path)
# -----------------------------------------------------------------------------
def pack_representational_params(params, feature_map, embedding_dim):
    kmult = _k_multiple()
    D = int(embedding_dim)
    feat_cfg = feature_map["features"]

    fused_cfg, raw = [], {}
    for name, info in feat_cfg.items():
        if (info["type"] == "sequence"
                and info.get("pooling") not in ("sum", "average")):
            V = int(info["vocab_size"])
            Vp_r = _round_up(V, kmult)
            tbl = np.zeros((Vp_r, D), np.float32)
            tbl[:V] = np.asarray(params[name], np.float32)
            hi, lo = _split_bf16(tbl)
            raw[name] = {"hi": hi, "lo": lo, "Vp": Vp_r, "vocab_size": V}
        else:
            fused_cfg.append((name, info))

    order, vocab_entries = [], []
    n_avg = n_num = 0
    for out_idx, (name, info) in enumerate(fused_cfg):
        e = {"name": name, "kind": info["type"], "pooling": info.get("pooling"),
             "out_idx": out_idx, "vocab_idx": -1, "avg_idx": -1, "num_idx": -1,
             "vocab_size": 0}
        if info["type"] in ("categorical", "sequence"):
            e["vocab_idx"] = len(vocab_entries)
            e["vocab_size"] = int(info["vocab_size"])
            if info["type"] == "sequence" and info.get("pooling") == "average":
                e["avg_idx"] = n_avg
                n_avg += 1
            vocab_entries.append(e)
        else:  # numerical
            e["num_idx"] = n_num
            n_num += 1
        order.append(e)

    n_fused = len(order)
    ND = n_fused * D
    n_vocab = len(vocab_entries)
    Vp = _round_up(max([e["vocab_size"] for e in vocab_entries], default=1), kmult)

    W_hi = W_lo = NZ = numw = None
    if n_vocab:
        # Block-diagonal table: feature j's vocab block sits at K rows
        # [vocab_idx*Vp, ...) and output columns [out_idx*D, (out_idx+1)*D).
        W_np = np.zeros((n_vocab * Vp, ND), np.float32)
        NZ_np = np.zeros((max(n_avg, 1), n_vocab * Vp), np.float32)
        for e in vocab_entries:
            tbl = np.asarray(params[e["name"]], np.float32)  # (V, D)
            r0, c0 = e["vocab_idx"] * Vp, e["out_idx"] * D
            W_np[r0:r0 + tbl.shape[0], c0:c0 + D] = tbl
            if e["avg_idx"] >= 0:
                # Hoisted average-pool mask: a token counts iff its embedding
                # row-sum != 0 (exactly the PyTorch `emb.sum(-1) != 0` mask).
                NZ_np[e["avg_idx"], r0:r0 + tbl.shape[0]] = (tbl.sum(-1) != 0.0)
        W_hi, W_lo = _split_bf16(W_np)
        if n_avg:
            NZ = jnp.asarray(NZ_np, jnp.float32)
    if n_num:
        # nn.Linear(1, D, bias=False) weights, placed at their output columns.
        numw_np = np.zeros((n_num, ND), np.float32)
        for e in order:
            if e["num_idx"] >= 0:
                w = np.asarray(params[e["name"]], np.float32).reshape(-1)
                numw_np[e["num_idx"], e["out_idx"] * D:(e["out_idx"] + 1) * D] = w
        numw = jnp.asarray(numw_np)

    return {"D": D, "ND": ND, "Vp": Vp, "order": order,
            "n_vocab": n_vocab, "n_avg": n_avg, "n_num": n_num,
            "W_hi": W_hi, "W_lo": W_lo, "NZ": NZ, "numw": numw, "raw": raw}


# -----------------------------------------------------------------------------
# Fused kernel: every (B, D)-producing feature in one lane-dense (B, n*D) pass
# -----------------------------------------------------------------------------
def _make_fused_kernel(feats, Vp, D, ND, n_vocab, n_avg, n_num):
    vocab_feats = sorted([f for f in feats if f["vocab_idx"] >= 0],
                         key=lambda f: f["vocab_idx"])
    avg_feats = [f for f in feats if f["avg_idx"] >= 0]
    num_feats = sorted([f for f in feats if f["num_idx"] >= 0],
                       key=lambda f: f["num_idx"])

    def kernel(*refs):
        it = iter(refs)
        int_ref = next(it) if n_vocab else None
        f32_ref = next(it) if n_num else None
        whi_ref = next(it) if n_vocab else None
        wlo_ref = next(it) if n_vocab else None
        nz_ref = next(it) if n_avg else None
        numw_ref = next(it) if n_num else None
        out_ref = next(it)
        Bb = out_ref.shape[0]

        acc = None
        if n_vocab:
            # Single shared iota (common padded vocab width for every feature).
            iota_v = lax.broadcasted_iota(jnp.int32, (1, Vp), 1)
            pieces = []
            for f in vocab_feats:
                x = int_ref[:, f["int_col"]:f["int_col"] + f["n_cols"]]
                if f["n_cols"] == 1:
                    # categorical: one-hot row
                    p = (x == iota_v).astype(jnp.float32)
                else:
                    # pooled sequence: token counts via one vectorized
                    # 3-D compare + sublane reduce (counts <= L, exact in bf16)
                    p = jnp.sum((x[:, :, None] == iota_v[None, :, :])
                                .astype(jnp.float32), axis=1)
                pieces.append(p)
            lhs_f32 = (pieces[0] if len(pieces) == 1
                       else jnp.concatenate(pieces, axis=-1))
            lhs = lhs_f32.astype(jnp.bfloat16)  # exact: values are small ints
            # One block-diagonal, lane-dense (N = n*D) matmul; hi + lo bf16
            # passes reconstruct the f32 table product to ~2^-16 relative.
            acc = (jnp.dot(lhs, whi_ref[...], preferred_element_type=jnp.float32)
                   + jnp.dot(lhs, wlo_ref[...], preferred_element_type=jnp.float32))
            if n_avg:
                lane = lax.broadcasted_iota(jnp.int32, (1, ND), 1)
                scale = jnp.ones((Bb, ND), jnp.float32)
                for f in avg_feats:
                    j, a = f["out_idx"], f["avg_idx"]
                    # valid token count: counts . nz  (exact integers)
                    valid = jnp.sum(lhs_f32 * nz_ref[a:a + 1, :],
                                    axis=-1, keepdims=True)          # (Bb, 1)
                    recip = pl.reciprocal(valid + 1e-12, approx=False)
                    in_block = (lane >= j * D) & (lane < (j + 1) * D)
                    scale = jnp.where(in_block, recip, scale)
                acc = acc * scale  # non-average lanes multiply by exactly 1.0
        if n_num:
            # Linear(1, D, bias=False): exact f32 broadcast product on the VPU
            # (kept off the bf16 matmul path so it stays bit-exact).
            xn = f32_ref[...]
            nw = numw_ref[...]
            contrib = None
            for f in num_feats:
                j = f["num_idx"]
                term = xn[:, j:j + 1] * nw[j:j + 1, :]
                contrib = term if contrib is None else contrib + term
            acc = contrib if acc is None else acc + contrib

        out_ref[...] = acc  # single unmasked lane-dense (Bb, n*D) store

    return kernel


# -----------------------------------------------------------------------------
# Raw (un-pooled) sequence gather -> lane-dense (B, L*D), reshaped to (B, L, D)
# -----------------------------------------------------------------------------
def _make_raw_seq_kernel(L, D, Vp):
    def kernel(idx_ref, thi_ref, tlo_ref, out_ref):
        iota_v = lax.broadcasted_iota(jnp.int32, (1, Vp), 1)
        thi = thi_ref[...]
        tlo = tlo_ref[...]
        for l in range(L):  # static; all writes land in one lane-dense block
            oh = (idx_ref[:, l:l + 1] == iota_v).astype(jnp.bfloat16)
            out_ref[:, l * D:(l + 1) * D] = (
                jnp.dot(oh, thi, preferred_element_type=jnp.float32)
                + jnp.dot(oh, tlo, preferred_element_type=jnp.float32))
    return kernel


def _raw_seq_gather(idx, thi, tlo, L, D, Vp):
    # TODO(synk): for production vocab sizes replace the one-hot matmul with a
    # scalar-prefetch DMA row gather (table kept in HBM via memory_space=pl.ANY).
    B = idx.shape[0]
    block_b = _pick_block_b(B)
    out = pl.pallas_call(
        _make_raw_seq_kernel(L, D, Vp),
        out_shape=jax.ShapeDtypeStruct((B, L * D), jnp.float32),
        grid=(B // block_b,),
        in_specs=[pl.BlockSpec((block_b, L), lambda i: (i, 0)),
                  pl.BlockSpec(memory_space=pltpu.MemorySpace.VMEM),
                  pl.BlockSpec(memory_space=pltpu.MemorySpace.VMEM)],
        out_specs=pl.BlockSpec((block_b, L * D), lambda i: (i, 0)),
        compiler_params=pltpu.CompilerParams(
            dimension_semantics=("parallel",),
            vmem_limit_bytes=_VMEM_LIMIT_BYTES),
    )(idx, thi, tlo)
    return out.reshape(B, L, D)


# -----------------------------------------------------------------------------
# RepresentationalLayer.forward
# -----------------------------------------------------------------------------
def representational_layer_forward(X, packed):
    D, ND, Vp = packed["D"], packed["ND"], packed["Vp"]
    order = packed["order"]
    n_vocab, n_avg, n_num = packed["n_vocab"], packed["n_avg"], packed["n_num"]
    embeddings = {}

    if order:
        B = int(jnp.shape(X[order[0]["name"]])[0])
        block_b = _pick_block_b(B)

        # Pack per-row inputs into one int32 slab + one f32 slab.
        feats_rt, int_cols, f32_cols = [], [], []
        c_int = 0
        for e in order:
            e2 = dict(e)
            if e["kind"] in ("categorical", "sequence"):
                x = jnp.asarray(X[e["name"]]).reshape(B, -1).astype(jnp.int32)
                # nn.Embedding raises on out-of-range ids; clamp instead.
                x = jnp.clip(x, 0, e["vocab_size"] - 1)
                e2["int_col"], e2["n_cols"] = c_int, x.shape[1]
                c_int += x.shape[1]
                int_cols.append(x)
            else:
                f32_cols.append(jnp.asarray(X[e["name"]])
                                .reshape(B, 1).astype(jnp.float32))
            feats_rt.append(e2)

        inputs, in_specs = [], []
        if int_cols:
            slab = (int_cols[0] if len(int_cols) == 1
                    else jnp.concatenate(int_cols, axis=1))
            inputs.append(slab)
            in_specs.append(pl.BlockSpec((block_b, slab.shape[1]),
                                         lambda i: (i, 0)))
        if f32_cols:
            slab = (f32_cols[0] if len(f32_cols) == 1
                    else jnp.concatenate(f32_cols, axis=1))
            inputs.append(slab)
            in_specs.append(pl.BlockSpec((block_b, slab.shape[1]),
                                         lambda i: (i, 0)))
        # Grid-invariant tables: whole-array VMEM residents (single copy, not
        # part of the double-buffered pipeline).
        for p in (packed["W_hi"], packed["W_lo"], packed["NZ"], packed["numw"]):
            if p is not None:
                inputs.append(p)
                in_specs.append(pl.BlockSpec(memory_space=pltpu.MemorySpace.VMEM))

        fused = pl.pallas_call(
            _make_fused_kernel(feats_rt, Vp, D, ND, n_vocab, n_avg, n_num),
            out_shape=jax.ShapeDtypeStruct((B, ND), jnp.float32),
            grid=(B // block_b,),
            in_specs=in_specs,
            out_specs=pl.BlockSpec((block_b, ND), lambda i: (i, 0)),
            compiler_params=pltpu.CompilerParams(
                dimension_semantics=("parallel",),
                vmem_limit_bytes=_VMEM_LIMIT_BYTES),
        )(*inputs)

        # NOTE: production consumers should take `fused` (the lane-dense
        # (B, n*D) slab) directly; the per-feature dict below re-slices it only
        # to preserve the module's dict-of-embeddings interface.
        for e in order:
            j = e["out_idx"]
            embeddings[e["name"]] = fused[:, j * D:(j + 1) * D]

    for name, r in packed["raw"].items():
        x = jnp.asarray(X[name]).astype(jnp.int32)
        _, L = x.shape
        x = jnp.clip(x, 0, r["vocab_size"] - 1)
        embeddings[name] = _raw_seq_gather(x, r["hi"], r["lo"], L, D, r["Vp"])

    return embeddings


# -----------------------------------------------------------------------------
# Parameter construction (deterministic, mirrors init_weights / padding_idx)
# -----------------------------------------------------------------------------
def make_embedding_table(key, vocab_size, embedding_dim, pad_index=None):
    tbl = jax.random.normal(key, (vocab_size, embedding_dim), jnp.float32) * 1e-4
    if pad_index is not None:
        tbl = tbl.at[pad_index, :].set(0.0)
    return tbl


if __name__ == "__main__":
    B, L, D = 16, 8, 32
    feature_map = {
        "features": {
            "cat_feat": {"type": "categorical", "vocab_size": 103, "pad_index": 0},
            "seq_avg": {"type": "sequence", "vocab_size": 53, "pad_index": 0,
                        "pooling": "average"},
            "seq_sum": {"type": "sequence", "vocab_size": 37, "pad_index": 0,
                        "pooling": "sum"},
            "num_feat": {"type": "numerical"},
            "seq_raw": {"type": "sequence", "vocab_size": 29, "pad_index": 0},
        }
    }

    root = jax.random.PRNGKey(0)
    (k_cat, k_sa, k_ss, k_sr, k_w,
     k_i1, k_i2, k_i3, k_i4, k_x) = jax.random.split(root, 10)

    params = {
        "cat_feat": make_embedding_table(k_cat, 103, D, pad_index=0),
        "seq_avg": make_embedding_table(k_sa, 53, D, pad_index=0),
        "seq_sum": make_embedding_table(k_ss, 37, D, pad_index=0),
        "seq_raw": make_embedding_table(k_sr, 29, D, pad_index=0),
        # nn.Linear(1, D, bias=False): torch weight is (D, 1); store transpose.
        "num_feat": jax.random.normal(k_w, (1, D), jnp.float32) * 0.1,
    }

    x_cat = jax.random.randint(k_i1, (B,), 1, 103).astype(jnp.int32)
    x_sa = jax.random.randint(k_i2, (B, L), 0, 53).astype(jnp.int32)   # 0 = pad
    x_ss = jax.random.randint(k_i3, (B, L), 0, 37).astype(jnp.int32)
    x_sr = jax.random.randint(k_i4, (B, L), 0, 29).astype(jnp.int32)
    x_num = jax.random.normal(k_x, (B, 1), jnp.float32)

    X = {"cat_feat": x_cat, "seq_avg": x_sa, "seq_sum": x_ss,
         "seq_raw": x_sr, "num_feat": x_num}

    packed = pack_representational_params(params, feature_map, D)
    out = representational_layer_forward(X, packed)
    out = jax.tree_util.tree_map(jax.block_until_ready, out)

    # --- pure-JAX reference check (semantics of the PyTorch forward) ---------
    ref_cat = params["cat_feat"][x_cat]
    emb_sa = params["seq_avg"][x_sa]                                   # (B, L, D)
    mask = (emb_sa.sum(-1) != 0).astype(jnp.float32)                   # (B, L)
    ref_sa = emb_sa.sum(1) / (mask.sum(-1, keepdims=True) + 1e-12)
    ref_ss = params["seq_sum"][x_ss].sum(1)
    ref_raw = params["seq_raw"][x_sr]                                  # (B, L, D)
    ref_num = x_num * params["num_feat"]                               # Linear(1, D)

    np.testing.assert_allclose(np.asarray(out["cat_feat"]), np.asarray(ref_cat),
                               rtol=1e-5, atol=1e-6)
    np.testing.assert_allclose(np.asarray(out["seq_avg"]), np.asarray(ref_sa),
                               rtol=1e-5, atol=1e-6)
    np.testing.assert_allclose(np.asarray(out["seq_sum"]), np.asarray(ref_ss),
                               rtol=1e-5, atol=1e-6)
    np.testing.assert_allclose(np.asarray(out["seq_raw"]), np.asarray(ref_raw),
                               rtol=1e-5, atol=1e-6)
    np.testing.assert_allclose(np.asarray(out["num_feat"]), np.asarray(ref_num),
                               rtol=1e-5, atol=1e-6)

    print("KERNEL_OK")
</pallas_src>

<mosaic_0001>
module attributes {stable_mosaic.version = 11 : i64} {
  func.func @kernel(%arg0: i32, %arg1: memref<8x17xi32, #tpu.memory_space<vmem>>, %arg2: memref<8x1xf32, #tpu.memory_space<vmem>>, %arg3: memref<384x128xbf16, #tpu.memory_space<vmem>>, %arg4: memref<384x128xbf16, #tpu.memory_space<vmem>>, %arg5: memref<1x384xf32, #tpu.memory_space<vmem>>, %arg6: memref<1x128xf32, #tpu.memory_space<vmem>>, %arg7: memref<8x128xf32, #tpu.memory_space<vmem>>) attributes {dimension_semantics = [#tpu.dimension_semantics<parallel>], iteration_bounds = array<i64: 2>, scalar_prefetch = 0 : i64, scratch_operands = 0 : i64, tpu.core_type = #tpu.core_type<tc>, window_params = [{transform_indices = @transform_0, window_bounds = array<i64: 8, 17>}, {transform_indices = @transform_1, window_bounds = array<i64: 8, 1>}, {pipeline_mode = #tpu.pipeline_mode<synchronous>, transform_indices = @transform_2, window_bounds = array<i64: 384, 128>}, {pipeline_mode = #tpu.pipeline_mode<synchronous>, transform_indices = @transform_3, window_bounds = array<i64: 384, 128>}, {pipeline_mode = #tpu.pipeline_mode<synchronous>, transform_indices = @transform_4, window_bounds = array<i64: 1, 384>}, {pipeline_mode = #tpu.pipeline_mode<synchronous>, transform_indices = @transform_5, window_bounds = array<i64: 1, 128>}, {transform_indices = @transform_6, window_bounds = array<i64: 8, 128>}]} {
    %0 = tpu.iota {dimensions = array<i32: 1>} : vector<1x128xi32>
    %c0 = arith.constant 0 : index
    %c0_0 = arith.constant 0 : index
    %1 = vector.load %arg1[%c0, %c0_0] : memref<8x17xi32, #tpu.memory_space<vmem>>, vector<8x1xi32>
    %2 = vector.broadcast %1 : vector<8x1xi32> to vector<8x128xi32>
    %3 = vector.broadcast %0 : vector<1x128xi32> to vector<8x128xi32>
    %4 = arith.cmpi eq, %2, %3 : vector<8x128xi32>
    %5 = arith.extui %4 : vector<8x128xi1> to vector<8x128xi32>
    %6 = arith.sitofp %5 : vector<8x128xi32> to vector<8x128xf32>
    %c0_1 = arith.constant 0 : index
    %c1 = arith.constant 1 : index
    %7 = vector.load %arg1[%c0_1, %c1] : memref<8x17xi32, #tpu.memory_space<vmem>>, vector<8x8xi32>
    %8 = vector.shape_cast %7 : vector<8x8xi32> to vector<8x8x1xi32>
    %9 = vector.shape_cast %0 : vector<1x128xi32> to vector<1x1x128xi32>
    %10 = vector.broadcast %8 : vector<8x8x1xi32> to vector<8x8x128xi32>
    %11 = vector.broadcast %9 : vector<1x1x128xi32> to vector<8x8x128xi32>
    %12 = arith.cmpi eq, %10, %11 : vector<8x8x128xi32>
    %13 = arith.extui %12 : vector<8x8x128xi1> to vector<8x8x128xi32>
    %14 = arith.sitofp %13 : vector<8x8x128xi32> to vector<8x8x128xf32>
    %cst = arith.constant dense<0.000000e+00> : vector<8x128xf32>
    %15 = vector.multi_reduction <add>, %14, %cst [1] : vector<8x8x128xf32> to vector<8x128xf32>
    %c0_2 = arith.constant 0 : index
    %c9 = arith.constant 9 : index
    %16 = vector.load %arg1[%c0_2, %c9] : memref<8x17xi32, #tpu.memory_space<vmem>>, vector<8x8xi32>
    %17 = vector.shape_cast %16 : vector<8x8xi32> to vector<8x8x1xi32>
    %18 = vector.shape_cast %0 : vector<1x128xi32> to vector<1x1x128xi32>
    %19 = vector.broadcast %17 : vector<8x8x1xi32> to vector<8x8x128xi32>
    %20 = vector.broadcast %18 : vector<1x1x128xi32> to vector<8x8x128xi32>
    %21 = arith.cmpi eq, %19, %20 : vector<8x8x128xi32>
    %22 = arith.extui %21 : vector<8x8x128xi1> to vector<8x8x128xi32>
    %23 = arith.sitofp %22 : vector<8x8x128xi32> to vector<8x8x128xf32>
    %cst_3 = arith.constant dense<0.000000e+00> : vector<8x128xf32>
    %24 = vector.multi_reduction <add>, %23, %cst_3 [1] : vector<8x8x128xf32> to vector<8x128xf32>
    %25 = tpu.concatenate %6, %15, %24 in 1 : vector<8x128xf32>, vector<8x128xf32>, vector<8x128xf32> -> vector<8x384xf32>
    %26 = arith.truncf %25 : vector<8x384xf32> to vector<8x384xbf16>
    %c0_4 = arith.constant 0 : index
    %c0_5 = arith.constant 0 : index
    %27 = vector.load %arg3[%c0_4, %c0_5] : memref<384x128xbf16, #tpu.memory_space<vmem>>, vector<384x128xbf16>
    %cst_6 = arith.constant dense<0.000000e+00> : vector<8x128xf32>
    %28 = tpu.matmul %26, %27, %cst_6 {dimension_numbers = #tpu.dot_dimension_numbers<[1], [0], [0], [1], [0, 0, 1, 1], [], []>} : vector<8x384xbf16>, vector<384x128xbf16>, vector<8x128xf32> -> vector<8x128xf32>
    %c0_7 = arith.constant 0 : index
    %c0_8 = arith.constant 0 : index
    %29 = vector.load %arg4[%c0_7, %c0_8] : memref<384x128xbf16, #tpu.memory_space<vmem>>, vector<384x128xbf16>
    %cst_9 = arith.constant dense<0.000000e+00> : vector<8x128xf32>
    %30 = tpu.matmul %26, %29, %cst_9 {dimension_numbers = #tpu.dot_dimension_numbers<[1], [0], [0], [1], [0, 0, 1, 1], [], []>} : vector<8x384xbf16>, vector<384x128xbf16>, vector<8x128xf32> -> vector<8x128xf32>
    %31 = arith.addf %28, %30 : vector<8x128xf32>
    %32 = tpu.iota {dimensions = array<i32: 1>} : vector<1x128xi32>
    %cst_10 = arith.constant 1.000000e+00 : f32
    %33 = vector.broadcast %cst_10 : f32 to vector<8x128xf32>
    %c0_11 = arith.constant 0 : index
    %c0_12 = arith.constant 0 : index
    %34 = vector.load %arg5[%c0_11, %c0_12] : memref<1x384xf32, #tpu.memory_space<vmem>>, vector<1x384xf32>
    %35 = vector.broadcast %34 : vector<1x384xf32> to vector<8x384xf32>
    %36 = arith.mulf %25, %35 : vector<8x384xf32>
    %cst_13 = arith.constant dense<0.000000e+00> : vector<8xf32>
    %37 = vector.multi_reduction <add>, %36, %cst_13 [1] : vector<8x384xf32> to vector<8xf32>
    %38 = vector.shape_cast %37 : vector<8xf32> to vector<8x1xf32>
    %cst_14 = arith.constant 9.99999996E-13 : f32
    %39 = vector.broadcast %cst_14 : f32 to vector<8x1xf32>
    %40 = arith.addf %38, %39 : vector<8x1xf32>
    %41 = tpu.reciprocal %40 : vector<8x1xf32> -> vector<8x1xf32>
    %c32_i32 = arith.constant 32 : i32
    %42 = vector.broadcast %c32_i32 : i32 to vector<1x128xi32>
    %43 = arith.cmpi sge, %32, %42 : vector<1x128xi32>
    %c64_i32 = arith.constant 64 : i32
    %44 = vector.broadcast %c64_i32 : i32 to vector<1x128xi32>
    %45 = arith.cmpi slt, %32, %44 : vector<1x128xi32>
    %46 = arith.andi %43, %45 : vector<1x128xi1>
    %47 = vector.shape_cast %46 : vector<1x128xi1> to vector<1x128xi1>
    %48 = vector.broadcast %47 : vector<1x128xi1> to vector<8x128xi1>
    %49 = vector.shape_cast %41 : vector<8x1xf32> to vector<8x1xf32>
    %50 = vector.broadcast %49 : vector<8x1xf32> to vector<8x128xf32>
    %51 = arith.select %48, %50, %33 : vector<8x128xi1>, vector<8x128xf32>
    %52 = arith.mulf %31, %51 : vector<8x128xf32>
    %c0_15 = arith.constant 0 : index
    %c0_16 = arith.constant 0 : index
    %53 = vector.load %arg2[%c0_15, %c0_16] : memref<8x1xf32, #tpu.memory_space<vmem>>, vector<8x1xf32>
    %c0_17 = arith.constant 0 : index
    %c0_18 = arith.constant 0 : index
    %54 = vector.load %arg6[%c0_17, %c0_18] : memref<1x128xf32, #tpu.memory_space<vmem>>, vector<1x128xf32>
    %55 = vector.broadcast %53 : vector<8x1xf32> to vector<8x128xf32>
    %56 = vector.broadcast %54 : vector<1x128xf32> to vector<8x128xf32>
    %57 = arith.mulf %55, %56 : vector<8x128xf32>
    %58 = arith.addf %52, %57 : vector<8x128xf32>
    %c0_19 = arith.constant 0 : index
    %c0_20 = arith.constant 0 : index
    %59 = vector.load %arg7[%c0_19, %c0_20] : memref<8x128xf32, #tpu.memory_space<vmem>>, vector<8x128xf32>
    tpu.vector_store %arg7[%c0_19, %c0_20], %58 {strides = array<i32>} : memref<8x128xf32, #tpu.memory_space<vmem>>, vector<8x128xf32>,
    return
  }
  func.func @transform_0(%arg0: i32) -> (i32, i32) {
    %c0_i32 = arith.constant 0 : i32
    %c0_i32_0 = arith.constant 0 : i32
    return %arg0, %c0_i32 : i32, i32
  }
  func.func @transform_1(%arg0: i32) -> (i32, i32) {
    %c0_i32 = arith.constant 0 : i32
    %c0_i32_0 = arith.constant 0 : i32
    return %arg0, %c0_i32 : i32, i32
  }
  func.func @transform_2(%arg0: i32) -> (i32, i32) {
    %c0_i32 = arith.constant 0 : i32
    %c0_i32_0 = arith.constant 0 : i32
    %c0_i32_1 = arith.constant 0 : i32
    return %c0_i32, %c0_i32_0 : i32, i32
  }
  func.func @transform_3(%arg0: i32) -> (i32, i32) {
    %c0_i32 = arith.constant 0 : i32
    %c0_i32_0 = arith.constant 0 : i32
    %c0_i32_1 = arith.constant 0 : i32
    return %c0_i32, %c0_i32_0 : i32, i32
  }
  func.func @transform_4(%arg0: i32) -> (i32, i32) {
    %c0_i32 = arith.constant 0 : i32
    %c0_i32_0 = arith.constant 0 : i32
    %c0_i32_1 = arith.constant 0 : i32
    return %c0_i32, %c0_i32_0 : i32, i32
  }
  func.func @transform_5(%arg0: i32) -> (i32, i32) {
    %c0_i32 = arith.constant 0 : i32
    %c0_i32_0 = arith.constant 0 : i32
    %c0_i32_1 = arith.constant 0 : i32
    return %c0_i32, %c0_i32_0 : i32, i32
  }
  func.func @transform_6(%arg0: i32) -> (i32, i32) {
    %c0_i32 = arith.constant 0 : i32
    %c0_i32_0 = arith.constant 0 : i32
    return %arg0, %c0_i32 : i32, i32
  }
}

</mosaic_0001>

<llo_original>
// kernel: tpu_custom_call.1
$region0: #{tpu_custom_call.1}
  #allocation0 [shape = 'u32[]', space=smem, size = 0x4, offset = 0x4, fixed_abs, tag = 'smem constant byte address 0x4 - core index']
  #allocation1 [shape = 'u32[72,128]{1,0:T(1,128)}', space=vmem, size = 0x9000, scoped, tag = 'internal scratch']
  %s0 = inlined_call_operand.vmem [shape: s32[16,17], index: 0, kind: input, shape index: {}]
  %s1 = inlined_call_operand.vmem [shape: f32[16,1], index: 1, kind: input, shape index: {}]
  %s2 = inlined_call_operand.hbm [shape: bf16[384,128], index: 2, kind: input, shape index: {}]
  %s3 = inlined_call_operand.hbm [shape: bf16[384,128], index: 3, kind: input, shape index: {}]
  %s4 = inlined_call_operand.vmem [shape: f32[1,384], index: 4, kind: input, shape index: {}]
  %s5 = inlined_call_operand.vmem [shape: f32[1,128], index: 5, kind: input, shape index: {}]
  %s6 = inlined_call_operand.hbm [shape: f32[16,128], index: 6, kind: output, shape index: {}]
  %s7 = sld [smem:[#allocation0]]
  $region65: #{tpu_custom_call.1} parent=0
    _
  %s9 = ssub.s32 1, %s7
  %s10 = scalar_select 0, %s9, %s7
  $region1: #{tpu_custom_call.1} parent=0
    #allocation2 [shape = 'u8[98304]{0}', space=vmem, size = 0x18000, scoped, tag = 'input window, operand 2, single buffered']
    #allocation3 [shape = 's32[2]{0}', space=sflag, size = 0x8, scoped, tag = 'scoped memory for tpu_custom_call.1']
    #allocation4 [shape = 's32[2]{0}', space=sflag, size = 0x8, scoped, tag = 'scoped memory for tpu_custom_call.1']
    #allocation5 [shape = 'u8[98304]{0}', space=vmem, size = 0x18000, scoped, tag = 'input window, operand 3, single buffered']
    #allocation6 [shape = 's32[1]{0}', space=sflag, size = 0x4, scoped, tag = 'scoped memory for tpu_custom_call.1']
    #allocation7 [shape = 'u8[8192]{0}', space=vmem, size = 0x2000, scoped, tag = 'output window, operand 0']
    %11 = vsyncpa [#allocation3], 0
    %12 = vsyncpa [#allocation6], 0
    %13 = vsyncpa [#allocation4], 0
    %s14 = scalar_lea.sflag [#allocation4], 1
    %15 = vsyncpa %s14, 0
    loop: start=0, step=1, limit=4
    $region2: #{tpu_custom_call.1} parent=1 // loop_pre_header
      _
    $region3: #{tpu_custom_call.1} parent=1 // loop_header
      %s17 = sphi 0, %s21
      %p18 = scmp.ge.s32.totalorder %s17, 4
      %s27 = sphi 0, %s29
      %s30 = sphi 0, %s27
      %s31 = sphi 0, %s30
      %s47 = sphi 0, %s31
      %s53 = sphi 0, %s55
      %s56 = sphi 0, %s53
      %s57 = sphi 0, %s56
      %s73 = sphi 0, %s57
      %s77 = sphi 0, %s77
      %s79 = sphi 0, %s77
      %s80 = sphi 0, %s79
      %s94 = sphi 0, %s80
      %s98 = sphi 0, %s98
      %s100 = sphi 0, %s98
      %s101 = sphi 0, %s100
      %s115 = sphi 0, %s101
      %s119 = sphi 0, %s119
      %s121 = sphi 0, %s119
      %s122 = sphi 0, %s121
      %s136 = sphi 0, %s122
      %s140 = sphi 0, %s140
      %s142 = sphi 0, %s140
      %s143 = sphi 0, %s142
      %s157 = sphi 0, %s143
      %s163 = sphi 0, %s165
      %s166 = sphi 0, %s163
      %s167 = sphi 0, %s166
      %s183 = sphi 0, %s167
    $region4: #{tpu_custom_call.1} parent=1 // loop_header_branch
      %20 = sbr.rel (%p18) target = $region8
    $region5: #{tpu_custom_call.1} parent=1 // loop_body
      %s22 = ssub.s32 %s17, 1
      %s23 = ssub.s32 %s17, 2
      %s24 = sadd.s32 %s17, 1
      %s25 = ssub.s32 %s17, %s24
      %p26 = scmp.eq.s32.totalorder %s25, 0
      %s28 = sadd.s32 %s27, 1
      %s29 = scalar_select %p26, %s27, %s28
      %p32 = pneg %p26
      %p33 = scmp.eq.s32.totalorder %s17, 1
      %p34 = por %p32, %p33
      %p35 = scmp.ne.s32.totalorder %s27, %s30
      %p36 = scmp.eq.s32.totalorder %s17, 0
      %p37 = por %p35, %p36
      %p38 = scmp.ne.s32.totalorder %s27, %s30
      %p39 = scmp.eq.s32.totalorder %s22, 1
      %p40 = por %p38, %p39
      %p41 = scmp.ne.s32.totalorder %s30, %s31
      %p42 = scmp.eq.s32.totalorder %s22, 0
      %p43 = por %p41, %p42
      %p44 = scmp.ne.s32.totalorder %s30, %s31
      %p45 = scmp.eq.s32.totalorder %s23, 1
      %p46 = por %p44, %p45
      %p48 = scmp.ne.s32.totalorder %s31, %s47
      %p49 = scmp.eq.s32.totalorder %s23, 0
      %p50 = por %p48, %p49
      %s51 = ssub.s32 %s17, %s24
      %p52 = scmp.eq.s32.totalorder %s51, 0
      %s54 = sadd.s32 %s53, 1
      %s55 = scalar_select %p52, %s53, %s54
      %p58 = pneg %p52
      %p59 = scmp.eq.s32.totalorder %s17, 1
      %p60 = por %p58, %p59
      %p61 = scmp.ne.s32.totalorder %s53, %s56
      %p62 = scmp.eq.s32.totalorder %s17, 0
      %p63 = por %p61, %p62
      %p64 = scmp.ne.s32.totalorder %s53, %s56
      %p65 = scmp.eq.s32.totalorder %s22, 1
      %p66 = por %p64, %p65
      %p67 = scmp.ne.s32.totalorder %s56, %s57
      %p68 = scmp.eq.s32.totalorder %s22, 0
      %p69 = por %p67, %p68
      %p70 = scmp.ne.s32.totalorder %s56, %s57
      %p71 = scmp.eq.s32.totalorder %s23, 1
      %p72 = por %p70, %p71
      %p74 = scmp.ne.s32.totalorder %s57, %s73
      %p75 = scmp.eq.s32.totalorder %s23, 0
      %p76 = por %p74, %p75
      %s78 = sadd.s32 %s77, 1
      %p81 = scmp.eq.s32.totalorder %s17, 1
      %p82 = scmp.ne.s32.totalorder %s77, %s79
      %p83 = scmp.eq.s32.totalorder %s17, 0
      %p84 = por %p82, %p83
      %p85 = scmp.ne.s32.totalorder %s77, %s79
      %p86 = scmp.eq.s32.totalorder %s22, 1
      %p87 = por %p85, %p86
      %p88 = scmp.ne.s32.totalorder %s79, %s80
      %p89 = scmp.eq.s32.totalorder %s22, 0
      %p90 = por %p88, %p89
      %p91 = scmp.ne.s32.totalorder %s79, %s80
      %p92 = scmp.eq.s32.totalorder %s23, 1
      %p93 = por %p91, %p92
      %p95 = scmp.ne.s32.totalorder %s80, %s94
      %p96 = scmp.eq.s32.totalorder %s23, 0
      %p97 = por %p95, %p96
      %s99 = sadd.s32 %s98, 1
      %p102 = scmp.eq.s32.totalorder %s17, 1
      %p103 = scmp.ne.s32.totalorder %s98, %s100
      %p104 = scmp.eq.s32.totalorder %s17, 0
      %p105 = por %p103, %p104
      %p106 = scmp.ne.s32.totalorder %s98, %s100
      %p107 = scmp.eq.s32.totalorder %s22, 1
      %p108 = por %p106, %p107
      %p109 = scmp.ne.s32.totalorder %s100, %s101
      %p110 = scmp.eq.s32.totalorder %s22, 0
      %p111 = por %p109, %p110
      %p112 = scmp.ne.s32.totalorder %s100, %s101
      %p113 = scmp.eq.s32.totalorder %s23, 1
      %p114 = por %p112, %p113
      %p116 = scmp.ne.s32.totalorder %s101, %s115
      %p117 = scmp.eq.s32.totalorder %s23, 0
      %p118 = por %p116, %p117
      %s120 = sadd.s32 %s119, 1
      %p123 = scmp.eq.s32.totalorder %s17, 1
      %p124 = scmp.ne.s32.totalorder %s119, %s121
      %p125 = scmp.eq.s32.totalorder %s17, 0
      %p126 = por %p124, %p125
      %p127 = scmp.ne.s32.totalorder %s119, %s121
      %p128 = scmp.eq.s32.totalorder %s22, 1
      %p129 = por %p127, %p128
      %p130 = scmp.ne.s32.totalorder %s121, %s122
      %p131 = scmp.eq.s32.totalorder %s22, 0
      %p132 = por %p130, %p131
      %p133 = scmp.ne.s32.totalorder %s121, %s122
      %p134 = scmp.eq.s32.totalorder %s23, 1
      %p135 = por %p133, %p134
      %p137 = scmp.ne.s32.totalorder %s122, %s136
      %p138 = scmp.eq.s32.totalorder %s23, 0
      %p139 = por %p137, %p138
      %s141 = sadd.s32 %s140, 1
      %p144 = scmp.eq.s32.totalorder %s17, 1
      %p145 = scmp.ne.s32.totalorder %s140, %s142
      %p146 = scmp.eq.s32.totalorder %s17, 0
      %p147 = por %p145, %p146
      %p148 = scmp.ne.s32.totalorder %s140, %s142
      %p149 = scmp.eq.s32.totalorder %s22, 1
      %p150 = por %p148, %p149
      %p151 = scmp.ne.s32.totalorder %s142, %s143
      %p152 = scmp.eq.s32.totalorder %s22, 0
      %p153 = por %p151, %p152
      %p154 = scmp.ne.s32.totalorder %s142, %s143
      %p155 = scmp.eq.s32.totalorder %s23, 1
      %p156 = por %p154, %p155
      %p158 = scmp.ne.s32.totalorder %s143, %s157
      %p159 = scmp.eq.s32.totalorder %s23, 0
      %p160 = por %p158, %p159
      %s161 = ssub.s32 %s17, %s24
      %p162 = scmp.eq.s32.totalorder %s161, 0
      %s164 = sadd.s32 %s163, 1
      %s165 = scalar_select %p162, %s163, %s164
      %p168 = pneg %p162
      %p169 = scmp.eq.s32.totalorder %s17, 1
      %p170 = por %p168, %p169
      %p171 = scmp.ne.s32.totalorder %s163, %s166
      %p172 = scmp.eq.s32.totalorder %s17, 0
      %p173 = por %p171, %p172
      %p174 = scmp.ne.s32.totalorder %s163, %s166
      %p175 = scmp.eq.s32.totalorder %s22, 1
      %p176 = por %p174, %p175
      %p177 = scmp.ne.s32.totalorder %s166, %s167
      %p178 = scmp.eq.s32.totalorder %s22, 0
      %p179 = por %p177, %p178
      %p180 = scmp.ne.s32.totalorder %s166, %s167
      %p181 = scmp.eq.s32.totalorder %s23, 1
      %p182 = por %p180, %p181
      %p184 = scmp.ne.s32.totalorder %s167, %s183
      %p185 = scmp.eq.s32.totalorder %s23, 0
      %p186 = por %p184, %p185
      %p187 = scmp.le.s32.totalorder 1, %s17
      %p188 = scmp.lt.s32.totalorder %s17, 3
      %p189 = pnand %p187, %p188
      %p190 = pneg %p189
      // Predicated region
      $region9: #{tpu_custom_call.1} parent=5 // pred_check
        _
      $region10: #{tpu_custom_call.1} parent=5 // pred_check_branch
        %192 = sbr.rel (%p189) target = $region12
      $region11: #{tpu_custom_call.1} parent=5 // pred_region
        %s193 = ssub.s32 %s17, 1
        // Predicated region
        $region13: #{tpu_custom_call.1} parent=11 // pred_check
          %p194 = pneg %p90
        $region14: #{tpu_custom_call.1} parent=11 // pred_check_branch
          %196 = sbr.rel (%p194) target = $region16
        $region15: #{tpu_custom_call.1} parent=11 // pred_region
          %198 = vsyncadd [#allocation3], 0
          %s199 = sshll.u32 %s2, 4
          %s200 = int_to_ptr.hbm [resolvable:$true] %s199
          %s201 = sshll.u32 [#allocation2], 4
          %s202 = int_to_ptr.vmem [resolvable:$true] %s201
          %207 = dma.hbm_to_vmem [thread:$0]  %s200, 3072, %s202, [#allocation3], 64, 64, 4
        $region16: #{tpu_custom_call.1} parent=11 // pred_fallthru
          _
        // Predicated region
        $region17: #{tpu_custom_call.1} parent=11 // pred_check
          %p208 = pneg %p111
        $region18: #{tpu_custom_call.1} parent=11 // pred_check_branch
          %210 = sbr.rel (%p208) target = $region20
        $region19: #{tpu_custom_call.1} parent=11 // pred_region
          %212 = vsyncadd [#allocation6], 0
          %s213 = sshll.u32 %s3, 4
          %s214 = int_to_ptr.hbm [resolvable:$true] %s213
          %s215 = sshll.u32 [#allocation5], 4
          %s216 = int_to_ptr.vmem [resolvable:$true] %s215
          %221 = dma.hbm_to_vmem [thread:$0]  %s214, 3072, %s216, [#allocation6], 64, 64, 4
        $region20: #{tpu_custom_call.1} parent=11 // pred_fallthru
          _
        // Predicated region
        $region21: #{tpu_custom_call.1} parent=11 // pred_check
          %p222 = pneg %p132
        $region22: #{tpu_custom_call.1} parent=11 // pred_check_branch
          %224 = sbr.rel (%p222) target = $region24
        $region23: #{tpu_custom_call.1} parent=11 // pred_region
          _
        $region24: #{tpu_custom_call.1} parent=11 // pred_fallthru
          _
        // Predicated region
        $region25: #{tpu_custom_call.1} parent=11 // pred_check
          %p225 = pneg %p153
        $region26: #{tpu_custom_call.1} parent=11 // pred_check_branch
          %227 = sbr.rel (%p225) target = $region28
        $region27: #{tpu_custom_call.1} parent=11 // pred_region
          _
        $region28: #{tpu_custom_call.1} parent=11 // pred_fallthru
          _
      $region12: #{tpu_custom_call.1} parent=5 // pred_fallthru
        _
      %p228 = scmp.lt.s32.totalorder %s17, 2
      // Predicated region
      $region29: #{tpu_custom_call.1} parent=5 // pred_check
        %p229 = pneg %p228
      $region30: #{tpu_custom_call.1} parent=5 // pred_check_branch
        %231 = sbr.rel (%p229) target = $region32
      $region31: #{tpu_custom_call.1} parent=5 // pred_region
        // Predicated region
        $region33: #{tpu_custom_call.1} parent=31 // pred_check
          %p232 = pneg %p37
        $region34: #{tpu_custom_call.1} parent=31 // pred_check_branch
          %234 = sbr.rel (%p232) target = $region36
        $region35: #{tpu_custom_call.1} parent=31 // pred_region
          %p235 = scmp.lt.s32.totalorder %s17, 1
          %s236 = scalar_select %p235, %s17, 1
          %s237 = smul.addr %s236, 8
          %s238 = scalar_lea.vmem %s0, %s237
        $region36: #{tpu_custom_call.1} parent=31 // pred_fallthru
          _
        // Predicated region
        $region37: #{tpu_custom_call.1} parent=31 // pred_check
          %p239 = pneg %p63
        $region38: #{tpu_custom_call.1} parent=31 // pred_check_branch
          %241 = sbr.rel (%p239) target = $region40
        $region39: #{tpu_custom_call.1} parent=31 // pred_region
          %p242 = scmp.lt.s32.totalorder %s17, 1
          %s243 = scalar_select %p242, %s17, 1
          %s244 = smul.addr %s243, 8
          %s245 = scalar_lea.vmem %s1, %s244
        $region40: #{tpu_custom_call.1} parent=31 // pred_fallthru
          _
      $region32: #{tpu_custom_call.1} parent=5 // pred_fallthru
        _
      %p246 = scmp.le.s32.totalorder 1, %s17
      %p247 = scmp.lt.s32.totalorder %s17, 3
      %p248 = pnand %p246, %p247
      %p249 = pneg %p248
      // Predicated region
      $region41: #{tpu_custom_call.1} parent=5 // pred_check
        _
      $region42: #{tpu_custom_call.1} parent=5 // pred_check_branch
        %251 = sbr.rel (%p248) target = $region44
      $region43: #{tpu_custom_call.1} parent=5 // pred_region
        %s252 = ssub.s32 %s17, 1
        // Predicated region
        $region45: #{tpu_custom_call.1} parent=43 // pred_check
          %p253 = pneg %p90
        $region46: #{tpu_custom_call.1} parent=43 // pred_check_branch
          %255 = sbr.rel (%p253) target = $region48
        $region47: #{tpu_custom_call.1} parent=43 // pred_region
          %257 = dma.done [#allocation3], 3072
        $region48: #{tpu_custom_call.1} parent=43 // pred_fallthru
          _
        // Predicated region
        $region49: #{tpu_custom_call.1} parent=43 // pred_check
          %p258 = pneg %p111
        $region50: #{tpu_custom_call.1} parent=43 // pred_check_branch
          %260 = sbr.rel (%p258) target = $region52
        $region51: #{tpu_custom_call.1} parent=43 // pred_region
          %262 = dma.done [#allocation6], 3072
        $region52: #{tpu_custom_call.1} parent=43 // pred_fallthru
          _
        %p263 = scmp.lt.s32.totalorder %s22, 1
        %s264 = scalar_select %p263, %s22, 1
        %s265 = smul.addr %s264, 8
        %s266 = scalar_lea.vmem %s0, %s265
        %p267 = pneg %p43
        %p268 = pneg %p40
        %p269 = scmp.lt.s32.totalorder %s22, 1
        %s270 = scalar_select %p269, %s22, 1
        %s271 = smul.addr %s270, 8
        %s272 = scalar_lea.vmem %s1, %s271
        %p273 = pneg %p69
        %p274 = pneg %p66
        %p275 = pneg %p90
        %p276 = pneg %p87
        %p277 = pneg %p111
        %p278 = pneg %p108
        %p279 = pneg %p132
        %p280 = pneg %p129
        %p281 = pneg %p153
        %p282 = pneg %p150
        %p283 = pneg %p179
        %p284 = pneg %p176
        %s285 = sand.u32 %s166, 1
        %s286 = scalar_lea.sflag [#allocation4], %s285
        %s287 = sand.u32 %s166, 1
        %s288 = smul.addr %s287, 8
        %s289 = scalar_lea.vmem [#allocation7], %s288
        %p290 = scmp.lt.s32.totalorder %s22, 1
        %s291 = scalar_select %p290, %s22, 1
        %s292 = smul.addr %s291, 8
        %s293 = scalar_lea.vmem %s0, %s292
        %p294 = scmp.lt.s32.totalorder %s22, 1
        %s295 = scalar_select %p294, %s22, 1
        %s296 = smul.addr %s295, 8
        %s297 = scalar_lea.vmem %s1, %s296
        %v298 = vlaneseq
        %v299 = vand.u32 %v298, 127
        %v300 = vld [vmem:[%s293] sm:$0xff]
        %301 = vset.pattern.permute.xlu0 0
        %302 = vperm.xlu0 %301, %v300
        %v303 = vpop.permute.xlu0 %302
        %vm304 = vcmp.eq.s32.totalorder %v303, %v299
        %v305 = vsel %vm304, 1, 0
        %v306 = vcvt.s32.f32 %v305
        %v307 = vperm.slane %v300, 0
        %v308 = vlaneseq
        %v309 = vshrl.u32 %v308, 7
        %v310 = vadd.s32 %v309, 1
        %311 = vset.pattern.permute.xlu0 %v310
        %312 = vperm.xlu0 %311, %v307
        %v313 = vpop.permute.xlu0 %312
        %v314 = vperm.slane %v300, 1
        %v315 = vlaneseq
        %v316 = vshrl.u32 %v315, 7
        %v317 = vadd.s32 %v316, 1
        %318 = vset.pattern.permute.xlu0 %v317
        %319 = vperm.xlu0 %318, %v314
        %v320 = vpop.permute.xlu0 %319
        %v321 = vperm.slane %v300, 2
        %v322 = vlaneseq
        %v323 = vshrl.u32 %v322, 7
        %v324 = vadd.s32 %v323, 1
        %325 = vset.pattern.permute.xlu0 %v324
        %326 = vperm.xlu0 %325, %v321
        %v327 = vpop.permute.xlu0 %326
        %v328 = vperm.slane %v300, 3
        %v329 = vlaneseq
        %v330 = vshrl.u32 %v329, 7
        %v331 = vadd.s32 %v330, 1
        %332 = vset.pattern.permute.xlu0 %v331
        %333 = vperm.xlu0 %332, %v328
        %v334 = vpop.permute.xlu0 %333
        %v335 = vperm.slane %v300, 4
        %v336 = vlaneseq
        %v337 = vshrl.u32 %v336, 7
        %v338 = vadd.s32 %v337, 1
        %339 = vset.pattern.permute.xlu0 %v338
        %340 = vperm.xlu0 %339, %v335
        %v341 = vpop.permute.xlu0 %340
        %v342 = vperm.slane %v300, 5
        %v343 = vlaneseq
        %v344 = vshrl.u32 %v343, 7
        %v345 = vadd.s32 %v344, 1
        %346 = vset.pattern.permute.xlu0 %v345
        %347 = vperm.xlu0 %346, %v342
        %v348 = vpop.permute.xlu0 %347
        %v349 = vperm.slane %v300, 6
        %v350 = vlaneseq
        %v351 = vshrl.u32 %v350, 7
        %v352 = vadd.s32 %v351, 1
        %353 = vset.pattern.permute.xlu0 %v352
        %354 = vperm.xlu0 %353, %v349
        %v355 = vpop.permute.xlu0 %354
        %v356 = vperm.slane %v300, 7
        %v357 = vlaneseq
        %v358 = vshrl.u32 %v357, 7
        %v359 = vadd.s32 %v358, 1
        %360 = vset.pattern.permute.xlu0 %v359
        %361 = vperm.xlu0 %360, %v356
        %v362 = vpop.permute.xlu0 %361
        %vm363 = vcmp.eq.s32.totalorder %v313, %v299
        %vm364 = vcmp.eq.s32.totalorder %v320, %v299
        %vm365 = vcmp.eq.s32.totalorder %v327, %v299
        %vm366 = vcmp.eq.s32.totalorder %v334, %v299
        %vm367 = vcmp.eq.s32.totalorder %v341, %v299
        %vm368 = vcmp.eq.s32.totalorder %v348, %v299
        %vm369 = vcmp.eq.s32.totalorder %v355, %v299
        %vm370 = vcmp.eq.s32.totalorder %v362, %v299
        %v371 = vsel %vm363, 1, 0
        %v372 = vsel %vm364, 1, 0
        %v373 = vsel %vm365, 1, 0
        %v374 = vsel %vm366, 1, 0
        %v375 = vsel %vm367, 1, 0
        %v376 = vsel %vm368, 1, 0
        %v377 = vsel %vm369, 1, 0
        %v378 = vsel %vm370, 1, 0
        %v379 = vcvt.s32.f32 %v371
        %v380 = vcvt.s32.f32 %v372
        %v381 = vcvt.s32.f32 %v373
        %v382 = vcvt.s32.f32 %v374
        %v383 = vcvt.s32.f32 %v375
        %v384 = vcvt.s32.f32 %v376
        %v385 = vcvt.s32.f32 %v377
        %v386 = vcvt.s32.f32 %v378
        %v387 = vrot.slane %v379, 4
        %v388 = vadd.f32 %v379, %v387
        %v389 = vrot.slane %v388, 2
        %v390 = vadd.f32 %v388, %v389
        %v391 = vrot.slane %v390, 1
        %v392 = vadd.f32 %v390, %v391
        %v393 = vrot.slane %v380, 4
        %v394 = vadd.f32 %v380, %v393
        %v395 = vrot.slane %v394, 2
        %v396 = vadd.f32 %v394, %v395
        %v397 = vrot.slane %v396, 1
        %v398 = vadd.f32 %v396, %v397
        %v399 = vrot.slane %v381, 4
        %v400 = vadd.f32 %v381, %v399
        %v401 = vrot.slane %v400, 2
        %v402 = vadd.f32 %v400, %v401
        %v403 = vrot.slane %v402, 1
        %v404 = vadd.f32 %v402, %v403
        %v405 = vrot.slane %v382, 4
        %v406 = vadd.f32 %v382, %v405
        %v407 = vrot.slane %v406, 2
        %v408 = vadd.f32 %v406, %v407
        %v409 = vrot.slane %v408, 1
        %v410 = vadd.f32 %v408, %v409
        %v411 = vrot.slane %v383, 4
        %v412 = vadd.f32 %v383, %v411
        %v413 = vrot.slane %v412, 2
        %v414 = vadd.f32 %v412, %v413
        %v415 = vrot.slane %v414, 1
        %v416 = vadd.f32 %v414, %v415
        %v417 = vrot.slane %v384, 4
        %v418 = vadd.f32 %v384, %v417
        %v419 = vrot.slane %v418, 2
        %v420 = vadd.f32 %v418, %v419
        %v421 = vrot.slane %v420, 1
        %v422 = vadd.f32 %v420, %v421
        %v423 = vrot.slane %v385, 4
        %v424 = vadd.f32 %v385, %v423
        %v425 = vrot.slane %v424, 2
        %v426 = vadd.f32 %v424, %v425
        %v427 = vrot.slane %v426, 1
        %v428 = vadd.f32 %v426, %v427
        %v429 = vrot.slane %v386, 4
        %v430 = vadd.f32 %v386, %v429
        %v431 = vrot.slane %v430, 2
        %v432 = vadd.f32 %v430, %v431
        %v433 = vrot.slane %v432, 1
        %v434 = vadd.f32 %v432, %v433
        %v435 = vlaneseq
        %v436 = vshrl.u32 %v435, 7
        %v437 = vadd.s32 %v436, 9
        %438 = vset.pattern.permute.xlu0 %v437
        %439 = vperm.xlu0 %438, %v307
        %v440 = vpop.permute.xlu0 %439
        %v441 = vlaneseq
        %v442 = vshrl.u32 %v441, 7
        %v443 = vadd.s32 %v442, 9
        %444 = vset.pattern.permute.xlu0 %v443
        %445 = vperm.xlu0 %444, %v314
        %v446 = vpop.permute.xlu0 %445
        %v447 = vlaneseq
        %v448 = vshrl.u32 %v447, 7
        %v449 = vadd.s32 %v448, 9
        %450 = vset.pattern.permute.xlu0 %v449
        %451 = vperm.xlu0 %450, %v321
        %v452 = vpop.permute.xlu0 %451
        %v453 = vlaneseq
        %v454 = vshrl.u32 %v453, 7
        %v455 = vadd.s32 %v454, 9
        %456 = vset.pattern.permute.xlu0 %v455
        %457 = vperm.xlu0 %456, %v328
        %v458 = vpop.permute.xlu0 %457
        %v459 = vlaneseq
        %v460 = vshrl.u32 %v459, 7
        %v461 = vadd.s32 %v460, 9
        %462 = vset.pattern.permute.xlu0 %v461
        %463 = vperm.xlu0 %462, %v335
        %v464 = vpop.permute.xlu0 %463
        %v465 = vlaneseq
        %v466 = vshrl.u32 %v465, 7
        %v467 = vadd.s32 %v466, 9
        %468 = vset.pattern.permute.xlu0 %v467
        %469 = vperm.xlu0 %468, %v342
        %v470 = vpop.permute.xlu0 %469
        %v471 = vlaneseq
        %v472 = vshrl.u32 %v471, 7
        %v473 = vadd.s32 %v472, 9
        %474 = vset.pattern.permute.xlu0 %v473
        %475 = vperm.xlu0 %474, %v349
        %v476 = vpop.permute.xlu0 %475
        %v477 = vlaneseq
        %v478 = vshrl.u32 %v477, 7
        %v479 = vadd.s32 %v478, 9
        %480 = vset.pattern.permute.xlu0 %v479
        %481 = vperm.xlu0 %480, %v356
        %v482 = vpop.permute.xlu0 %481
        %vm483 = vcmp.eq.s32.totalorder %v440, %v299
        %vm484 = vcmp.eq.s32.totalorder %v446, %v299
        %vm485 = vcmp.eq.s32.totalorder %v452, %v299
        %vm486 = vcmp.eq.s32.totalorder %v458, %v299
        %vm487 = vcmp.eq.s32.totalorder %v464, %v299
        %vm488 = vcmp.eq.s32.totalorder %v470, %v299
        %vm489 = vcmp.eq.s32.totalorder %v476, %v299
        %vm490 = vcmp.eq.s32.totalorder %v482, %v299
        %v491 = vsel %vm483, 1, 0
        %v492 = vsel %vm484, 1, 0
        %v493 = vsel %vm485, 1, 0
        %v494 = vsel %vm486, 1, 0
        %v495 = vsel %vm487, 1, 0
        %v496 = vsel %vm488, 1, 0
        %v497 = vsel %vm489, 1, 0
        %v498 = vsel %vm490, 1, 0
        %v499 = vcvt.s32.f32 %v491
        %v500 = vcvt.s32.f32 %v492
        %v501 = vcvt.s32.f32 %v493
        %v502 = vcvt.s32.f32 %v494
        %v503 = vcvt.s32.f32 %v495
        %v504 = vcvt.s32.f32 %v496
        %v505 = vcvt.s32.f32 %v497
        %v506 = vcvt.s32.f32 %v498
        %v507 = vrot.slane %v499, 4
        %v508 = vadd.f32 %v499, %v507
        %v509 = vrot.slane %v508, 2
        %v510 = vadd.f32 %v508, %v509
        %v511 = vrot.slane %v510, 1
        %v512 = vadd.f32 %v510, %v511
        %v513 = vrot.slane %v500, 4
        %v514 = vadd.f32 %v500, %v513
        %v515 = vrot.slane %v514, 2
        %v516 = vadd.f32 %v514, %v515
        %v517 = vrot.slane %v516, 1
        %v518 = vadd.f32 %v516, %v517
        %v519 = vrot.slane %v501, 4
        %v520 = vadd.f32 %v501, %v519
        %v521 = vrot.slane %v520, 2
        %v522 = vadd.f32 %v520, %v521
        %v523 = vrot.slane %v522, 1
        %v524 = vadd.f32 %v522, %v523
        %v525 = vrot.slane %v502, 4
        %v526 = vadd.f32 %v502, %v525
        %v527 = vrot.slane %v526, 2
        %v528 = vadd.f32 %v526, %v527
        %v529 = vrot.slane %v528, 1
        %v530 = vadd.f32 %v528, %v529
        %v531 = vrot.slane %v503, 4
        %v532 = vadd.f32 %v503, %v531
        %v533 = vrot.slane %v532, 2
        %v534 = vadd.f32 %v532, %v533
        %v535 = vrot.slane %v534, 1
        %v536 = vadd.f32 %v534, %v535
        %v537 = vrot.slane %v504, 4
        %v538 = vadd.f32 %v504, %v537
        %v539 = vrot.slane %v538, 2
        %v540 = vadd.f32 %v538, %v539
        %v541 = vrot.slane %v540, 1
        %v542 = vadd.f32 %v540, %v541
        %v543 = vrot.slane %v505, 4
        %v544 = vadd.f32 %v505, %v543
        %v545 = vrot.slane %v544, 2
        %v546 = vadd.f32 %v544, %v545
        %v547 = vrot.slane %v546, 1
        %v548 = vadd.f32 %v546, %v547
        %v549 = vrot.slane %v506, 4
        %v550 = vadd.f32 %v506, %v549
        %v551 = vrot.slane %v550, 2
        %v552 = vadd.f32 %v550, %v551
        %v553 = vrot.slane %v552, 1
        %v554 = vadd.f32 %v552, %v553
        %vm563 = vcmask 1041409
        %v564 = vsel %vm563, %v398, %v392
        %vm565 = vcmask 1042434
        %v566 = vsel %vm565, %v404, %v564
        %vm567 = vcmask 1043459
        %v568 = vsel %vm567, %v410, %v566
        %vm569 = vcmask 1044484
        %v570 = vsel %vm569, %v416, %v568
        %vm571 = vcmask 1045509
        %v572 = vsel %vm571, %v422, %v570
        %vm573 = vcmask 1046534
        %v574 = vsel %vm573, %v428, %v572
        %vm575 = vcmask 1047559
        %v576 = vsel %vm575, %v434, %v574
        %v586 = vsel %vm563, %v518, %v512
        %v587 = vsel %vm565, %v524, %v586
        %v588 = vsel %vm567, %v530, %v587
        %v589 = vsel %vm569, %v536, %v588
        %v590 = vsel %vm571, %v542, %v589
        %v591 = vsel %vm573, %v548, %v590
        %v592 = vsel %vm575, %v554, %v591
        %v594 = vpack.c.bf16 %v306, %v306
        %v595 = vpack.c.bf16 %v576, %v576
        %v596 = vpack.c.bf16 %v592, %v592
        %v597 = vld [vmem:[#allocation2] sm:$0xf]
        %v598 = vld [vmem:[#allocation2 + $0x4] sm:$0xf]
        %v599 = vld [vmem:[#allocation2 + $0x8] sm:$0xf]
        %v600 = vld [vmem:[#allocation2 + $0xc] sm:$0xf]
        %v601 = vld [vmem:[#allocation2 + $0x10] sm:$0xf]
        %v602 = vld [vmem:[#allocation2 + $0x14] sm:$0xf]
        %v603 = vld [vmem:[#allocation2 + $0x18] sm:$0xf]
        %v604 = vld [vmem:[#allocation2 + $0x1c] sm:$0xf]
        %v605 = vld [vmem:[#allocation2 + $0x20] sm:$0xf]
        %v606 = vld [vmem:[#allocation2 + $0x24] sm:$0xf]
        %v607 = vld [vmem:[#allocation2 + $0x28] sm:$0xf]
        %v608 = vld [vmem:[#allocation2 + $0x2c] sm:$0xf]
        %v609 = vld [vmem:[#allocation2 + $0x30] sm:$0xf]
        %v610 = vld [vmem:[#allocation2 + $0x34] sm:$0xf]
        %v611 = vld [vmem:[#allocation2 + $0x38] sm:$0xf]
        %v612 = vld [vmem:[#allocation2 + $0x3c] sm:$0xf]
        %v613 = vld [vmem:[#allocation2 + $0x40] sm:$0xf]
        %v614 = vld [vmem:[#allocation2 + $0x44] sm:$0xf]
        %v615 = vld [vmem:[#allocation2 + $0x48] sm:$0xf]
        %v616 = vld [vmem:[#allocation2 + $0x4c] sm:$0xf]
        %v617 = vld [vmem:[#allocation2 + $0x50] sm:$0xf]
        %v618 = vld [vmem:[#allocation2 + $0x54] sm:$0xf]
        %v619 = vld [vmem:[#allocation2 + $0x58] sm:$0xf]
        %v620 = vld [vmem:[#allocation2 + $0x5c] sm:$0xf]
        %v621 = vld [vmem:[#allocation2 + $0x60] sm:$0xf]
        %v622 = vld [vmem:[#allocation2 + $0x64] sm:$0xf]
        %v623 = vld [vmem:[#allocation2 + $0x68] sm:$0xf]
        %v624 = vld [vmem:[#allocation2 + $0x6c] sm:$0xf]
        %v625 = vld [vmem:[#allocation2 + $0x70] sm:$0xf]
        %v626 = vld [vmem:[#allocation2 + $0x74] sm:$0xf]
        %v627 = vld [vmem:[#allocation2 + $0x78] sm:$0xf]
        %v628 = vld [vmem:[#allocation2 + $0x7c] sm:$0xf]
        %v629 = vld [vmem:[#allocation2 + $0x80] sm:$0xf]
        %v630 = vld [vmem:[#allocation2 + $0x84] sm:$0xf]
        %v631 = vld [vmem:[#allocation2 + $0x88] sm:$0xf]
        %v632 = vld [vmem:[#allocation2 + $0x8c] sm:$0xf]
        %v633 = vld [vmem:[#allocation2 + $0x90] sm:$0xf]
        %v634 = vld [vmem:[#allocation2 + $0x94] sm:$0xf]
        %v635 = vld [vmem:[#allocation2 + $0x98] sm:$0xf]
        %v636 = vld [vmem:[#allocation2 + $0x9c] sm:$0xf]
        %v637 = vld [vmem:[#allocation2 + $0xa0] sm:$0xf]
        %v638 = vld [vmem:[#allocation2 + $0xa4] sm:$0xf]
        %v639 = vld [vmem:[#allocation2 + $0xa8] sm:$0xf]
        %v640 = vld [vmem:[#allocation2 + $0xac] sm:$0xf]
        %v641 = vld [vmem:[#allocation2 + $0xb0] sm:$0xf]
        %v642 = vld [vmem:[#allocation2 + $0xb4] sm:$0xf]
        %v643 = vld [vmem:[#allocation2 + $0xb8] sm:$0xf]
        %v644 = vld [vmem:[#allocation2 + $0xbc] sm:$0xf]
        %v645 = vld [vmem:[#allocation5] sm:$0xf]
        %v646 = vld [vmem:[#allocation5 + $0x4] sm:$0xf]
        %v647 = vld [vmem:[#allocation5 + $0x8] sm:$0xf]
        %v648 = vld [vmem:[#allocation5 + $0xc] sm:$0xf]
        %v649 = vld [vmem:[#allocation5 + $0x10] sm:$0xf]
        %v650 = vld [vmem:[#allocation5 + $0x14] sm:$0xf]
        %v651 = vld [vmem:[#allocation5 + $0x18] sm:$0xf]
        %v652 = vld [vmem:[#allocation5 + $0x1c] sm:$0xf]
        %v653 = vld [vmem:[#allocation5 + $0x20] sm:$0xf]
        %v654 = vld [vmem:[#allocation5 + $0x24] sm:$0xf]
        %v655 = vld [vmem:[#allocation5 + $0x28] sm:$0xf]
        %v656 = vld [vmem:[#allocation5 + $0x2c] sm:$0xf]
        %v657 = vld [vmem:[#allocation5 + $0x30] sm:$0xf]
        %v658 = vld [vmem:[#allocation5 + $0x34] sm:$0xf]
        %v659 = vld [vmem:[#allocation5 + $0x38] sm:$0xf]
        %v660 = vld [vmem:[#allocation5 + $0x3c] sm:$0xf]
        %v661 = vld [vmem:[#allocation5 + $0x40] sm:$0xf]
        %v662 = vld [vmem:[#allocation5 + $0x44] sm:$0xf]
        %v663 = vld [vmem:[#allocation5 + $0x48] sm:$0xf]
        %v664 = vld [vmem:[#allocation5 + $0x4c] sm:$0xf]
        %v665 = vld [vmem:[#allocation5 + $0x50] sm:$0xf]
        %v666 = vld [vmem:[#allocation5 + $0x54] sm:$0xf]
        %v667 = vld [vmem:[#allocation5 + $0x58] sm:$0xf]
        %v668 = vld [vmem:[#allocation5 + $0x5c] sm:$0xf]
        %v669 = vld [vmem:[#allocation5 + $0x60] sm:$0xf]
        %v670 = vld [vmem:[#allocation5 + $0x64] sm:$0xf]
        %v671 = vld [vmem:[#allocation5 + $0x68] sm:$0xf]
        %v672 = vld [vmem:[#allocation5 + $0x6c] sm:$0xf]
        %v673 = vld [vmem:[#allocation5 + $0x70] sm:$0xf]
        %v674 = vld [vmem:[#allocation5 + $0x74] sm:$0xf]
        %v675 = vld [vmem:[#allocation5 + $0x78] sm:$0xf]
        %v676 = vld [vmem:[#allocation5 + $0x7c] sm:$0xf]
        %v677 = vld [vmem:[#allocation5 + $0x80] sm:$0xf]
        %v678 = vld [vmem:[#allocation5 + $0x84] sm:$0xf]
        %v679 = vld [vmem:[#allocation5 + $0x88] sm:$0xf]
        %v680 = vld [vmem:[#allocation5 + $0x8c] sm:$0xf]
        %v681 = vld [vmem:[#allocation5 + $0x90] sm:$0xf]
        %v682 = vld [vmem:[#allocation5 + $0x94] sm:$0xf]
        %v683 = vld [vmem:[#allocation5 + $0x98] sm:$0xf]
        %v684 = vld [vmem:[#allocation5 + $0x9c] sm:$0xf]
        %v685 = vld [vmem:[#allocation5 + $0xa0] sm:$0xf]
        %v686 = vld [vmem:[#allocation5 + $0xa4] sm:$0xf]
        %v687 = vld [vmem:[#allocation5 + $0xa8] sm:$0xf]
        %v688 = vld [vmem:[#allocation5 + $0xac] sm:$0xf]
        %v689 = vld [vmem:[#allocation5 + $0xb0] sm:$0xf]
        %v690 = vld [vmem:[#allocation5 + $0xb4] sm:$0xf]
        %v691 = vld [vmem:[#allocation5 + $0xb8] sm:$0xf]
        %v692 = vld [vmem:[#allocation5 + $0xbc] sm:$0xf]
        %v741 = vunpack.c.l.b16 %v645
        %v742 = vunpack.c.l.b16 %v646
        %v743 = vunpack.c.l.b16 %v647
        %v744 = vunpack.c.l.b16 %v648
        %v745 = vunpack.c.l.b16 %v649
        %v746 = vunpack.c.l.b16 %v650
        %v747 = vunpack.c.l.b16 %v651
        %v748 = vunpack.c.l.b16 %v652
        %v749 = vunpack.c.l.b16 %v653
        %v750 = vunpack.c.l.b16 %v654
        %v751 = vunpack.c.l.b16 %v655
        %v752 = vunpack.c.l.b16 %v656
        %v753 = vunpack.c.l.b16 %v657
        %v754 = vunpack.c.l.b16 %v658
        %v755 = vunpack.c.l.b16 %v659
        %v756 = vunpack.c.l.b16 %v660
        %v757 = vunpack.c.l.b16 %v661
        %v758 = vunpack.c.l.b16 %v662
        %v759 = vunpack.c.l.b16 %v663
        %v760 = vunpack.c.l.b16 %v664
        %v761 = vunpack.c.l.b16 %v665
        %v762 = vunpack.c.l.b16 %v666
        %v763 = vunpack.c.l.b16 %v667
        %v764 = vunpack.c.l.b16 %v668
        %v765 = vunpack.c.l.b16 %v669
        %v766 = vunpack.c.l.b16 %v670
        %v767 = vunpack.c.l.b16 %v671
        %v768 = vunpack.c.l.b16 %v672
        %v769 = vunpack.c.l.b16 %v673
        %v770 = vunpack.c.l.b16 %v674
        %v771 = vunpack.c.l.b16 %v675
        %v772 = vunpack.c.l.b16 %v676
        %v773 = vunpack.c.l.b16 %v677
        %v774 = vunpack.c.l.b16 %v678
        %v775 = vunpack.c.l.b16 %v679
        %v776 = vunpack.c.l.b16 %v680
        %v777 = vunpack.c.l.b16 %v681
        %v778 = vunpack.c.l.b16 %v682
        %v779 = vunpack.c.l.b16 %v683
        %v780 = vunpack.c.l.b16 %v684
        %v781 = vunpack.c.l.b16 %v685
        %v782 = vunpack.c.l.b16 %v686
        %v783 = vunpack.c.l.b16 %v687
        %v784 = vunpack.c.l.b16 %v688
        %v785 = vunpack.c.l.b16 %v689
        %v786 = vunpack.c.l.b16 %v690
        %v787 = vunpack.c.l.b16 %v691
        %v788 = vunpack.c.l.b16 %v692
        %v789 = vpack.c.b16 %v742, %v741
        %v790 = vpack.c.b16 %v744, %v743
        %v791 = vpack.c.b16 %v746, %v745
        %v792 = vpack.c.b16 %v748, %v747
        %v793 = vpack.c.b16 %v750, %v749
        %v794 = vpack.c.b16 %v752, %v751
        %v795 = vpack.c.b16 %v754, %v753
        %v796 = vpack.c.b16 %v756, %v755
        %v797 = vpack.c.b16 %v758, %v757
        %v798 = vpack.c.b16 %v760, %v759
        %v799 = vpack.c.b16 %v762, %v761
        %v800 = vpack.c.b16 %v764, %v763
        %v801 = vpack.c.b16 %v766, %v765
        %v802 = vpack.c.b16 %v768, %v767
        %v803 = vpack.c.b16 %v770, %v769
        %v804 = vpack.c.b16 %v772, %v771
        %v805 = vpack.c.b16 %v774, %v773
        %v806 = vpack.c.b16 %v776, %v775
        %v807 = vpack.c.b16 %v778, %v777
        %v808 = vpack.c.b16 %v780, %v779
        %v809 = vpack.c.b16 %v782, %v781
        %v810 = vpack.c.b16 %v784, %v783
        %v811 = vpack.c.b16 %v786, %v785
        %v812 = vpack.c.b16 %v788, %v787
        %837 = vmatpush.bf16.msra.mxu0 %v796
        %838 = vmatpush.bf16.msra.mxu0 %v795
        %839 = vmatpush.bf16.msra.mxu0 %v794
        %840 = vmatpush.bf16.msra.mxu0 %v793
        %841 = vmatpush.bf16.msra.mxu0 %v792
        %842 = vmatpush.bf16.msra.mxu0 %v791
        %843 = vmatpush.bf16.msra.mxu0 %v790
        %844 = vmatpush.bf16.msra.mxu0 %v789
        %845 = vmatmul.bf16.gmra.mxu0 %v594
        %v846 = vpop.f32.mrf.mxu0
        %v847 = vadd.f32 0.0, %v846
        %v848 = vpop.f32.mrf.mxu0
        %849 = vdwg.mxu0
        %850 = vmatpush.bf16.msra.mxu0 %v804
        %851 = vmatpush.bf16.msra.mxu0 %v803
        %852 = vmatpush.bf16.msra.mxu0 %v802
        %853 = vmatpush.bf16.msra.mxu0 %v801
        %854 = vmatpush.bf16.msra.mxu0 %v800
        %855 = vmatpush.bf16.msra.mxu0 %v799
        %856 = vmatpush.bf16.msra.mxu0 %v798
        %857 = vmatpush.bf16.msra.mxu0 %v797
        %858 = vmatmul.bf16.gmra.mxu0 %v595
        %v859 = vpop.f32.mrf.mxu0
        %v860 = vadd.f32 %v847, %v859
        %v861 = vpop.f32.mrf.mxu0
        %862 = vdwg.mxu0
        %863 = vmatpush.bf16.msra.mxu0 %v812
        %864 = vmatpush.bf16.msra.mxu0 %v811
        %865 = vmatpush.bf16.msra.mxu0 %v810
        %866 = vmatpush.bf16.msra.mxu0 %v809
        %867 = vmatpush.bf16.msra.mxu0 %v808
        %868 = vmatpush.bf16.msra.mxu0 %v807
        %869 = vmatpush.bf16.msra.mxu0 %v806
        %870 = vmatpush.bf16.msra.mxu0 %v805
        %871 = vmatmul.bf16.gmra.mxu0 %v596
        %v872 = vpop.f32.mrf.mxu0
        %v873 = vadd.f32 %v860, %v872
        %v874 = vpop.f32.mrf.mxu0
        %875 = vdwg.mxu0
        %v924 = vunpack.c.l.b16 %v597
        %v925 = vunpack.c.l.b16 %v598
        %v926 = vunpack.c.l.b16 %v599
        %v927 = vunpack.c.l.b16 %v600
        %v928 = vunpack.c.l.b16 %v601
        %v929 = vunpack.c.l.b16 %v602
        %v930 = vunpack.c.l.b16 %v603
        %v931 = vunpack.c.l.b16 %v604
        %v932 = vunpack.c.l.b16 %v605
        %v933 = vunpack.c.l.b16 %v606
        %v934 = vunpack.c.l.b16 %v607
        %v935 = vunpack.c.l.b16 %v608
        %v936 = vunpack.c.l.b16 %v609
        %v937 = vunpack.c.l.b16 %v610
        %v938 = vunpack.c.l.b16 %v611
        %v939 = vunpack.c.l.b16 %v612
        %v940 = vunpack.c.l.b16 %v613
        %v941 = vunpack.c.l.b16 %v614
        %v942 = vunpack.c.l.b16 %v615
        %v943 = vunpack.c.l.b16 %v616
        %v944 = vunpack.c.l.b16 %v617
        %v945 = vunpack.c.l.b16 %v618
        %v946 = vunpack.c.l.b16 %v619
        %v947 = vunpack.c.l.b16 %v620
        %v948 = vunpack.c.l.b16 %v621
        %v949 = vunpack.c.l.b16 %v622
        %v950 = vunpack.c.l.b16 %v623
        %v951 = vunpack.c.l.b16 %v624
        %v952 = vunpack.c.l.b16 %v625
        %v953 = vunpack.c.l.b16 %v626
        %v954 = vunpack.c.l.b16 %v627
        %v955 = vunpack.c.l.b16 %v628
        %v956 = vunpack.c.l.b16 %v629
        %v957 = vunpack.c.l.b16 %v630
        %v958 = vunpack.c.l.b16 %v631
        %v959 = vunpack.c.l.b16 %v632
        %v960 = vunpack.c.l.b16 %v633
        %v961 = vunpack.c.l.b16 %v634
        %v962 = vunpack.c.l.b16 %v635
        %v963 = vunpack.c.l.b16 %v636
        %v964 = vunpack.c.l.b16 %v637
        %v965 = vunpack.c.l.b16 %v638
        %v966 = vunpack.c.l.b16 %v639
        %v967 = vunpack.c.l.b16 %v640
        %v968 = vunpack.c.l.b16 %v641
        %v969 = vunpack.c.l.b16 %v642
        %v970 = vunpack.c.l.b16 %v643
        %v971 = vunpack.c.l.b16 %v644
        %v972 = vpack.c.b16 %v925, %v924
        %v973 = vpack.c.b16 %v927, %v926
        %v974 = vpack.c.b16 %v929, %v928
        %v975 = vpack.c.b16 %v931, %v930
        %v976 = vpack.c.b16 %v933, %v932
        %v977 = vpack.c.b16 %v935, %v934
        %v978 = vpack.c.b16 %v937, %v936
        %v979 = vpack.c.b16 %v939, %v938
        %v980 = vpack.c.b16 %v941, %v940
        %v981 = vpack.c.b16 %v943, %v942
        %v982 = vpack.c.b16 %v945, %v944
        %v983 = vpack.c.b16 %v947, %v946
        %v984 = vpack.c.b16 %v949, %v948
        %v985 = vpack.c.b16 %v951, %v950
        %v986 = vpack.c.b16 %v953, %v952
        %v987 = vpack.c.b16 %v955, %v954
        %v988 = vpack.c.b16 %v957, %v956
        %v989 = vpack.c.b16 %v959, %v958
        %v990 = vpack.c.b16 %v961, %v960
        %v991 = vpack.c.b16 %v963, %v962
        %v992 = vpack.c.b16 %v965, %v964
        %v993 = vpack.c.b16 %v967, %v966
        %v994 = vpack.c.b16 %v969, %v968
        %v995 = vpack.c.b16 %v971, %v970
        %1020 = vmatpush.bf16.msra.mxu0 %v979
        %1021 = vmatpush.bf16.msra.mxu0 %v978
        %1022 = vmatpush.bf16.msra.mxu0 %v977
        %1023 = vmatpush.bf16.msra.mxu0 %v976
        %1024 = vmatpush.bf16.msra.mxu0 %v975
        %1025 = vmatpush.bf16.msra.mxu0 %v974
        %1026 = vmatpush.bf16.msra.mxu0 %v973
        %1027 = vmatpush.bf16.msra.mxu0 %v972
        %1028 = vmatmul.bf16.gmra.mxu0 %v594
        %v1029 = vpop.f32.mrf.mxu0
        %v1030 = vadd.f32 %v873, %v1029
        %v1031 = vpop.f32.mrf.mxu0
        %1032 = vdwg.mxu0
        %1033 = vmatpush.bf16.msra.mxu0 %v987
        %1034 = vmatpush.bf16.msra.mxu0 %v986
        %1035 = vmatpush.bf16.msra.mxu0 %v985
        %1036 = vmatpush.bf16.msra.mxu0 %v984
        %1037 = vmatpush.bf16.msra.mxu0 %v983
        %1038 = vmatpush.bf16.msra.mxu0 %v982
        %1039 = vmatpush.bf16.msra.mxu0 %v981
        %1040 = vmatpush.bf16.msra.mxu0 %v980
        %1041 = vmatmul.bf16.gmra.mxu0 %v595
        %v1042 = vpop.f32.mrf.mxu0
        %v1043 = vadd.f32 %v1030, %v1042
        %v1044 = vpop.f32.mrf.mxu0
        %1045 = vdwg.mxu0
        %1046 = vmatpush.bf16.msra.mxu0 %v995
        %1047 = vmatpush.bf16.msra.mxu0 %v994
        %1048 = vmatpush.bf16.msra.mxu0 %v993
        %1049 = vmatpush.bf16.msra.mxu0 %v992
        %1050 = vmatpush.bf16.msra.mxu0 %v991
        %1051 = vmatpush.bf16.msra.mxu0 %v990
        %1052 = vmatpush.bf16.msra.mxu0 %v989
        %1053 = vmatpush.bf16.msra.mxu0 %v988
        %1054 = vmatmul.bf16.gmra.mxu0 %v596
        %v1055 = vpop.f32.mrf.mxu0
        %v1056 = vadd.f32 %v1043, %v1055
        %v1057 = vpop.f32.mrf.mxu0
        %1058 = vdwg.mxu0
        %v1059 = vld [vmem:[%s4] sm:$0x7]
        %v1061 = vperm.slane %v1059, 0
        %v1062 = vperm.slane %v1059, 1
        %v1063 = vperm.slane %v1059, 2
        %v1067 = vmul.f32 %v306, %v1061
        %v1068 = vmul.f32 %v576, %v1062
        %v1069 = vmul.f32 %v592, %v1063
        %v1070 = vadd.f32 %v1067, %v1068
        %v1071 = vadd.f32 %v1070, %v1069
        %1072 = vadd.xlane.f32.xlu0 %v1071
        %v1073 = vpop.xlane.xlu0 %1072
        %v1074 = vadd.f32 %v1073, 1e-12
        %v1075 = vrcp.pop %v1074
        %v1076 = vmul.f32 %v1074, %v1075
        %v1077 = vsub.f32 1.0, %v1076
        %v1078 = vmul.f32 %v1075, %v1077
        %v1079 = vadd.f32 %v1075, %v1078
        %vm1080 = vweird.f32 %v1074
        %vm1081 = vweird.f32 %v1075
        %vm1082 = vmor %vm1080, %vm1081
        %v1083 = vsel %vm1082, %v1075, %v1079
        %v1084 = vand.u32 2147483647, %v1074
        %vm1085 = vcmp.eq.f32.partialorder %v1084, 8.507059e+37
        %v1086 = vand.u32 %v1074, 2147483648
        %v1087 = vor.u32 1.1754944e-38, %v1086
        %v1088 = vsel %vm1085, %v1087, %v1083
        %vm1089 = vcmp.ge.s32.totalorder %v299, 32
        %vm1090 = vcmp.lt.s32.totalorder %v299, 64
        %vm1091 = vmand %vm1089, %vm1090
        %v1092 = vsel %vm1091, 1, 0
        %vm1093 = vcmp.eq.s32.totalorder %v1092, 1
        %v1094 = vsel %vm1093, %v1088, 1.0
        %v1095 = vmul.f32 %v1056, %v1094
        %v1096 = vld [vmem:[%s297] sm:$0xff]
        %v1097 = vld [vmem:[%s5] sm:$0x1]
        %1099 = vset.pattern.permute.xlu0 0
        %1100 = vperm.xlu0 %1099, %v1096
        %v1101 = vpop.permute.xlu0 %1100
        %v1104 = vperm.slane %v1097, 0
        %v1106 = vmul.f32 %v1101, %v1104
        %v1107 = vadd.f32 %v1095, %v1106
        %1108 = vst [vmem:[%s289] sm:$0xff] %v1107
        %s1109 = sand.u32 %s166, 1
        %s1110 = scalar_lea.sflag [#allocation4], %s1109
        %s1111 = sand.u32 %s166, 1
        %s1112 = smul.addr %s1111, 8
        %s1113 = scalar_lea.vmem [#allocation7], %s1112
        // Predicated region
        $region53: #{tpu_custom_call.1} parent=43 // pred_check
          %p1114 = pneg %p176
        $region54: #{tpu_custom_call.1} parent=43 // pred_check_branch
          %1116 = sbr.rel (%p1114) target = $region56
        $region55: #{tpu_custom_call.1} parent=43 // pred_region
          %1118 = vsyncadd %s1110, 0
          %s1119 = smul.addr %s22, 8
          %s1120 = scalar_lea.hbm %s6, %s1119
          %s1122 = sshll.u32 %s1113, 4
          %s1123 = int_to_ptr.vmem [resolvable:$true] %s1122
          %s1124 = sshll.u32 %s1120, 4
          %s1125 = int_to_ptr.hbm [resolvable:$true] %s1124
          %1127 = dma.vmem_to_hbm [thread:$0]  %s1123, 128, %s1125, %s1110
        $region56: #{tpu_custom_call.1} parent=43 // pred_fallthru
          _
      $region44: #{tpu_custom_call.1} parent=5 // pred_fallthru
        _
      %p1128 = scmp.le.s32.totalorder 2, %s17
      // Predicated region
      $region57: #{tpu_custom_call.1} parent=5 // pred_check
        %p1129 = pneg %p1128
      $region58: #{tpu_custom_call.1} parent=5 // pred_check_branch
        %1131 = sbr.rel (%p1129) target = $region60
      $region59: #{tpu_custom_call.1} parent=5 // pred_region
        %s1132 = ssub.s32 %s17, 2
        // Predicated region
        $region61: #{tpu_custom_call.1} parent=59 // pred_check
          %p1133 = pneg %p182
        $region62: #{tpu_custom_call.1} parent=59 // pred_check_branch
          %1135 = sbr.rel (%p1133) target = $region64
        $region63: #{tpu_custom_call.1} parent=59 // pred_region
          %s1136 = sand.u32 %s167, 1
          %s1137 = scalar_lea.sflag [#allocation4], %s1136
          %s1138 = sand.u32 %s167, 1
          %s1139 = smul.addr %s1138, 8
          %s1140 = scalar_lea.vmem [#allocation7], %s1139
          %1142 = dma.done %s1137, 128
        $region64: #{tpu_custom_call.1} parent=59 // pred_fallthru
          _
      $region60: #{tpu_custom_call.1} parent=5 // pred_fallthru
        _
    $region6: #{tpu_custom_call.1} parent=1 // loop_footer
      %s21 = sadd.s32 1, %s17
    $region7: #{tpu_custom_call.1} parent=1 // loop_footer_branch
      %16 = sbr.rel target = $region3
    $region8: #{tpu_custom_call.1} parent=1 // loop_exit
      _
    %1143 = vsyncpa [#allocation3], 1
    %s1144 = scalar_lea.sflag [#allocation3], 1
    %1145 = vsyncpa %s1144, 1
    %1146 = vsyncpa [#allocation6], 1
    %1147 = vsyncpa [#allocation4], 1
    %s1148 = scalar_lea.sflag [#allocation4], 1
    %1149 = vsyncpa %s1148, 1

</llo_original>
